<compile_context>
chip_gen: v5e
topology: v5e:2x2
jax: 0.10.0
libtpu: 0.0.40
codegen_flags: <defaults>
</compile_context>

<pallas_src>
import functools

import jax
import jax.numpy as jnp
from jax.experimental import pallas as pl
from jax.experimental.pallas import tpu as pltpu


def _round_up(a, b):
    return (a + b - 1) // b * b


def _tv_loss_kernel(x_ref, out_ref, *, W, HW, tm, M_pad, mask_rows):
    x = x_ref[...].astype(jnp.float32)  # [tm, HW]

    if mask_rows:
        # Tail block extends past the (padded) array: zero out-of-range rows.
        row = jax.lax.broadcasted_iota(jnp.int32, (tm, 1), 0)
        global_row = pl.program_id(0) * tm + row
        x = jnp.where(global_row < M_pad, x, 0.0)

    # h-direction: x[h+1, w] - x[h, w]  ==  flat[j + W] - flat[j], j < HW - W
    dh = x[:, W:] - x[:, :HW - W]
    h_ss = jnp.sum(dh * dh)

    # w-direction: x[h, w+1] - x[h, w]  ==  flat[j + 1] - flat[j], j % W != W - 1
    dw = x[:, 1:] - x[:, :HW - 1]
    col = jax.lax.broadcasted_iota(jnp.int32, (tm, HW - 1), 1)
    dw = jnp.where((col % W) != (W - 1), dw, 0.0)
    w_ss = jnp.sum(dw * dw)

    # Lane-padded per-block partials: lane 0 = h_ss, lane 1 = w_ss, rest zero.
    lane = jax.lax.broadcasted_iota(jnp.int32, (1, 1, 128), 2)
    out_ref[...] = jnp.where(lane == 0, h_ss,
                             jnp.where(lane == 1, w_ss, 0.0))


def tv_loss(x, *, weight=0.001, target_block_bytes=2 * 1024 * 1024):
    """x: [B, C, D, H, W]. Returns scalar f32 TV loss (matches the torch module)."""
    B, C, D, H, W = x.shape
    M = B * C * D
    HW = H * W

    x2 = x.reshape(M, HW)

    # Sublane-pack: pad row count to a multiple of 8 with zero rows (TV-neutral).
    M_pad = _round_up(M, 8)
    if M_pad != M:
        x2 = jnp.concatenate(
            [x2, jnp.zeros((M_pad - M, HW), dtype=x2.dtype)], axis=0)

    # Row-block sized to ~target_block_bytes per pipeline buffer, multiple of 8.
    row_bytes = HW * x2.dtype.itemsize
    tm = max(8, (target_block_bytes // max(row_bytes, 1)) // 8 * 8)
    tm = min(tm, M_pad)
    grid = pl.cdiv(M_pad, tm)
    mask_rows = (M_pad % tm) != 0

    kernel = functools.partial(_tv_loss_kernel, W=W, HW=HW, tm=tm,
                               M_pad=M_pad, mask_rows=mask_rows)

    cost = pl.CostEstimate(
        flops=6 * M * HW,                                   # 2 diffs, 2 squares, 2 sums
        transcendentals=0,
        bytes_accessed=M_pad * HW * x2.dtype.itemsize + grid * 128 * 4,
    )

    partials = pl.pallas_call(
        kernel,
        out_shape=jax.ShapeDtypeStruct((grid, 1, 128), jnp.float32),
        grid_spec=pltpu.PrefetchScalarGridSpec(
            num_scalar_prefetch=0,
            grid=(grid,),
            in_specs=[pl.BlockSpec((tm, HW), lambda i: (i, 0))],
            out_specs=pl.BlockSpec((1, 1, 128), lambda i: (i, 0, 0)),
        ),
        compiler_params=pltpu.CompilerParams(
            dimension_semantics=("parallel",),          # independent blocks -> both TCs on v7x
            vmem_limit_bytes=32 * 1024 * 1024,
        ),
        cost_estimate=cost,
    )(x2)

    h_tv = jnp.sum(partials[:, 0, 0])
    w_tv = jnp.sum(partials[:, 0, 1])
    count_h = C * D * (H - 1) * W
    count_w = C * D * H * (W - 1)
    return weight * 2.0 * (h_tv / count_h + w_tv / count_w) / (B + D)


def tv_loss_ref(x, weight=0.001):
    """Pure-JAX reference mirroring the PyTorch TVLoss module."""
    B, C, D, H, W = x.shape
    xf = x.astype(jnp.float32)
    h_tv = jnp.sum((xf[:, :, :, 1:, :] - xf[:, :, :, :H - 1, :]) ** 2)
    w_tv = jnp.sum((xf[:, :, :, :, 1:] - xf[:, :, :, :, :W - 1]) ** 2)
    count_h = C * D * (H - 1) * W
    count_w = C * D * H * (W - 1)
    return weight * 2.0 * (h_tv / count_h + w_tv / count_w) / (B + D)


if __name__ == "__main__":
    key = jax.random.PRNGKey(0)

    B, C, D, H, W = 2, 4, 8, 16, 16   # 5-D input, as the forward implies
    x = jax.random.normal(key, (B, C, D, H, W), dtype=jnp.float32)

    loss = jax.block_until_ready(tv_loss(x))
    ref = jax.block_until_ready(tv_loss_ref(x))

    assert jnp.allclose(loss, ref, rtol=1e-5, atol=1e-7), (loss, ref)
    print("KERNEL_OK")
</pallas_src>

<mosaic_0001>
module attributes {stable_mosaic.version = 11 : i64} {
  func.func @_tv_loss_kernel(%arg0: i32, %arg1: memref<64x256xf32, #tpu.memory_space<vmem>>, %arg2: memref<1x1x128xf32, #tpu.memory_space<vmem>>) attributes {dimension_semantics = [#tpu.dimension_semantics<parallel>], iteration_bounds = array<i64: 1>, scalar_prefetch = 0 : i64, scratch_operands = 0 : i64, tpu.core_type = #tpu.core_type<tc>, window_params = [{transform_indices = @transform_0, window_bounds = array<i64: 64, 256>}, {transform_indices = @transform_1, window_bounds = array<i64: 1, 1, 128>}]} {
    %c0 = arith.constant 0 : index
    %c0_0 = arith.constant 0 : index
    %0 = vector.load %arg1[%c0, %c0_0] : memref<64x256xf32, #tpu.memory_space<vmem>>, vector<64x256xf32>
    %1 = vector.extract_strided_slice %0 {offsets = [0, 16], sizes = [64, 240], strides = [1, 1]} : vector<64x256xf32> to vector<64x240xf32>
    %2 = vector.extract_strided_slice %0 {offsets = [0, 0], sizes = [64, 240], strides = [1, 1]} : vector<64x256xf32> to vector<64x240xf32>
    %3 = arith.subf %1, %2 : vector<64x240xf32>
    %4 = arith.mulf %3, %3 : vector<64x240xf32>
    %5 = vector.shape_cast %4 : vector<64x240xf32> to vector<1x64x240xf32>
    %cst = arith.constant dense<0.000000e+00> : vector<1xf32>
    %6 = vector.multi_reduction <add>, %5, %cst [1, 2] : vector<1x64x240xf32> to vector<1xf32>
    %7 = vector.shape_cast %6 : vector<1xf32> to vector<1x1x1xf32>
    %8 = vector.extract %7[0, 0, 0] : f32 from vector<1x1x1xf32>
    %9 = vector.extract_strided_slice %0 {offsets = [0, 1], sizes = [64, 255], strides = [1, 1]} : vector<64x256xf32> to vector<64x255xf32>
    %10 = vector.extract_strided_slice %0 {offsets = [0, 0], sizes = [64, 255], strides = [1, 1]} : vector<64x256xf32> to vector<64x255xf32>
    %11 = arith.subf %9, %10 : vector<64x255xf32>
    %12 = tpu.iota {dimensions = array<i32: 1>} : vector<64x255xi32>
    %c16_i32 = arith.constant 16 : i32
    %c0_i32 = arith.constant 0 : i32
    %13 = arith.cmpi eq, %c16_i32, %c0_i32 : i32
    %c1_i32 = arith.constant 1 : i32
    %14 = arith.select %13, %c1_i32, %c16_i32 : i32
    %15 = vector.broadcast %14 : i32 to vector<64x255xi32>
    %16 = arith.remsi %12, %15 : vector<64x255xi32>
    %c0_i32_1 = arith.constant 0 : i32
    %17 = vector.broadcast %c0_i32_1 : i32 to vector<64x255xi32>
    %18 = arith.cmpi ne, %16, %17 : vector<64x255xi32>
    %c0_i32_2 = arith.constant 0 : i32
    %19 = vector.broadcast %c0_i32_2 : i32 to vector<64x255xi32>
    %20 = arith.cmpi slt, %16, %19 : vector<64x255xi32>
    %c0_i32_3 = arith.constant 0 : i32
    %21 = arith.cmpi slt, %14, %c0_i32_3 : i32
    %22 = vector.broadcast %21 : i1 to vector<64x255xi1>
    %23 = vector.broadcast %22 : vector<64x255xi1> to vector<64x255xi1>
    %24 = arith.xori %20, %23 : vector<64x255xi1>
    %25 = arith.andi %24, %18 : vector<64x255xi1>
    %26 = vector.broadcast %14 : i32 to vector<64x255xi32>
    %27 = arith.addi %16, %26 : vector<64x255xi32>
    %28 = arith.select %25, %27, %16 : vector<64x255xi1>, vector<64x255xi32>
    %c15_i32 = arith.constant 15 : i32
    %29 = vector.broadcast %c15_i32 : i32 to vector<64x255xi32>
    %30 = arith.cmpi ne, %28, %29 : vector<64x255xi32>
    %cst_4 = arith.constant 0.000000e+00 : f32
    %31 = vector.broadcast %cst_4 : f32 to vector<64x255xf32>
    %32 = arith.select %30, %11, %31 : vector<64x255xi1>, vector<64x255xf32>
    %33 = arith.mulf %32, %32 : vector<64x255xf32>
    %34 = vector.shape_cast %33 : vector<64x255xf32> to vector<1x64x255xf32>
    %cst_5 = arith.constant dense<0.000000e+00> : vector<1xf32>
    %35 = vector.multi_reduction <add>, %34, %cst_5 [1, 2] : vector<1x64x255xf32> to vector<1xf32>
    %36 = vector.shape_cast %35 : vector<1xf32> to vector<1x1x1xf32>
    %37 = vector.extract %36[0, 0, 0] : f32 from vector<1x1x1xf32>
    %38 = tpu.iota {dimensions = array<i32: 2>} : vector<1x1x128xi32>
    %c0_i32_6 = arith.constant 0 : i32
    %39 = vector.broadcast %c0_i32_6 : i32 to vector<1x1x128xi32>
    %40 = arith.cmpi eq, %38, %39 : vector<1x1x128xi32>
    %c1_i32_7 = arith.constant 1 : i32
    %41 = vector.broadcast %c1_i32_7 : i32 to vector<1x1x128xi32>
    %42 = arith.cmpi eq, %38, %41 : vector<1x1x128xi32>
    %cst_8 = arith.constant 0.000000e+00 : f32
    %43 = vector.broadcast %37 : f32 to vector<1x1x128xf32>
    %44 = vector.broadcast %cst_8 : f32 to vector<1x1x128xf32>
    %45 = arith.select %42, %43, %44 : vector<1x1x128xi1>, vector<1x1x128xf32>
    %46 = vector.broadcast %8 : f32 to vector<1x1x128xf32>
    %47 = arith.select %40, %46, %45 : vector<1x1x128xi1>, vector<1x1x128xf32>
    %c0_9 = arith.constant 0 : index
    %c0_10 = arith.constant 0 : index
    %c0_11 = arith.constant 0 : index
    %48 = vector.load %arg2[%c0_9, %c0_10, %c0_11] : memref<1x1x128xf32, #tpu.memory_space<vmem>>, vector<1x1x128xf32>
    tpu.vector_store %arg2[%c0_9, %c0_10, %c0_11], %47 {strides = array<i32>} : memref<1x1x128xf32, #tpu.memory_space<vmem>>, vector<1x1x128xf32>,
    return
  }
  func.func @transform_0(%arg0: i32) -> (i32, i32) {
    %c0_i32 = arith.constant 0 : i32
    %c0_i32_0 = arith.constant 0 : i32
    return %arg0, %c0_i32 : i32, i32
  }
  func.func @transform_1(%arg0: i32) -> (i32, i32, i32) {
    %c0_i32 = arith.constant 0 : i32
    %c0_i32_0 = arith.constant 0 : i32
    %c0_i32_1 = arith.constant 0 : i32
    return %arg0, %c0_i32, %c0_i32_0 : i32, i32, i32
  }
}

</mosaic_0001>

<llo_original>
// kernel: tpu_custom_call.1
$region0: #{tpu_custom_call.1}
  #allocation0 [shape = 'u32[]', space=smem, size = 0x4, offset = 0x4, fixed_abs, tag = 'smem constant byte address 0x4 - core index']
  #allocation1 [shape = 'u32[72,128]{1,0:T(1,128)}', space=vmem, size = 0x9000, scoped, tag = 'internal scratch']
  %s0 = inlined_call_operand.hbm [shape: f32[64,256], index: 0, kind: input, shape index: {}]
  %s1 = inlined_call_operand.hbm [shape: f32[1,1,128], index: 1, kind: output, shape index: {}]
  %s2 = sld [smem:[#allocation0]]
  $region18: #{tpu_custom_call.1} parent=0
    _
  %s4 = ssub.s32 1, %s2
  %s5 = scalar_select 0, %s4, %s2
  $region1: #{tpu_custom_call.1} parent=0
    #allocation2 [shape = 'u8[65536]{0}', space=vmem, size = 0x10000, scoped, tag = 'input window, operand 0, single buffered']
    #allocation3 [shape = 's32[1]{0}', space=sflag, size = 0x4, scoped, tag = 'scoped memory for tpu_custom_call.1']
    #allocation4 [shape = 's32[1]{0}', space=sflag, size = 0x4, scoped, tag = 'scoped memory for tpu_custom_call.1']
    #allocation5 [shape = 'u8[512]{0}', space=vmem, size = 0x400, scoped, tag = 'output window, operand 0, single buffered']
    %6 = vsyncpa [#allocation3], 0
    %7 = vsyncpa [#allocation4], 0
    // Predicated region
    $region2: #{tpu_custom_call.1} parent=1 // pred_check
      _
    $region3: #{tpu_custom_call.1} parent=1 // pred_check_branch
      %9 = sbr.rel (0) target = $region5
    $region4: #{tpu_custom_call.1} parent=1 // pred_region
      %11 = vsyncadd [#allocation3], 0
      %s12 = sshll.u32 %s0, 4
      %s13 = int_to_ptr.hbm [resolvable:$true] %s12
      %s14 = sshll.u32 [#allocation2], 4
      %s15 = int_to_ptr.vmem [resolvable:$true] %s14
      %20 = dma.hbm_to_vmem [thread:$0]  %s13, 2048, %s15, [#allocation3], 256, 256, 16
    $region5: #{tpu_custom_call.1} parent=1 // pred_fallthru
      _
    // Predicated region
    $region6: #{tpu_custom_call.1} parent=1 // pred_check
      _
    $region7: #{tpu_custom_call.1} parent=1 // pred_check_branch
      %22 = sbr.rel (0) target = $region9
    $region8: #{tpu_custom_call.1} parent=1 // pred_region
      %24 = dma.done [#allocation3], 2048
    $region9: #{tpu_custom_call.1} parent=1 // pred_fallthru
      _
    %v25 = vld [vmem:[#allocation2] sm:$0xff]
    %v26 = vld [vmem:[#allocation2 + $0x8] sm:$0xff]
    %v27 = vld [vmem:[#allocation2 + $0x10] sm:$0xff]
    %v28 = vld [vmem:[#allocation2 + $0x18] sm:$0xff]
    %v29 = vld [vmem:[#allocation2 + $0x20] sm:$0xff]
    %v30 = vld [vmem:[#allocation2 + $0x28] sm:$0xff]
    %v31 = vld [vmem:[#allocation2 + $0x30] sm:$0xff]
    %v32 = vld [vmem:[#allocation2 + $0x38] sm:$0xff]
    %v33 = vld [vmem:[#allocation2 + $0x40] sm:$0xff]
    %v34 = vld [vmem:[#allocation2 + $0x48] sm:$0xff]
    %v35 = vld [vmem:[#allocation2 + $0x50] sm:$0xff]
    %v36 = vld [vmem:[#allocation2 + $0x58] sm:$0xff]
    %v37 = vld [vmem:[#allocation2 + $0x60] sm:$0xff]
    %v38 = vld [vmem:[#allocation2 + $0x68] sm:$0xff]
    %v39 = vld [vmem:[#allocation2 + $0x70] sm:$0xff]
    %v40 = vld [vmem:[#allocation2 + $0x78] sm:$0xff]
    %57 = vrot.lane.b32.xlu0 %v25, 16
    %v58 = vpop.permute.xlu0 %57
    %59 = vrot.lane.b32.xlu0 %v26, 16
    %v60 = vpop.permute.xlu0 %59
    %61 = vrot.lane.b32.xlu0 %v27, 16
    %v62 = vpop.permute.xlu0 %61
    %63 = vrot.lane.b32.xlu0 %v28, 16
    %v64 = vpop.permute.xlu0 %63
    %65 = vrot.lane.b32.xlu0 %v29, 16
    %v66 = vpop.permute.xlu0 %65
    %67 = vrot.lane.b32.xlu0 %v30, 16
    %v68 = vpop.permute.xlu0 %67
    %69 = vrot.lane.b32.xlu0 %v31, 16
    %v70 = vpop.permute.xlu0 %69
    %71 = vrot.lane.b32.xlu0 %v32, 16
    %v72 = vpop.permute.xlu0 %71
    %73 = vrot.lane.b32.xlu0 %v33, 16
    %v74 = vpop.permute.xlu0 %73
    %75 = vrot.lane.b32.xlu0 %v34, 16
    %v76 = vpop.permute.xlu0 %75
    %77 = vrot.lane.b32.xlu0 %v35, 16
    %v78 = vpop.permute.xlu0 %77
    %79 = vrot.lane.b32.xlu0 %v36, 16
    %v80 = vpop.permute.xlu0 %79
    %81 = vrot.lane.b32.xlu0 %v37, 16
    %v82 = vpop.permute.xlu0 %81
    %83 = vrot.lane.b32.xlu0 %v38, 16
    %v84 = vpop.permute.xlu0 %83
    %85 = vrot.lane.b32.xlu0 %v39, 16
    %v86 = vpop.permute.xlu0 %85
    %87 = vrot.lane.b32.xlu0 %v40, 16
    %v88 = vpop.permute.xlu0 %87
    %vm89 = vcmask 130048
    %v90 = vsel %vm89, %v58, %v60
    %v91 = vsel %vm89, %v62, %v64
    %v92 = vsel %vm89, %v66, %v68
    %v93 = vsel %vm89, %v70, %v72
    %v94 = vsel %vm89, %v74, %v76
    %v95 = vsel %vm89, %v78, %v80
    %v96 = vsel %vm89, %v82, %v84
    %v97 = vsel %vm89, %v86, %v88
    %v114 = vsub.f32 %v25, %v58
    %v115 = vsub.f32 %v26, %v90
    %v116 = vsub.f32 %v27, %v62
    %v117 = vsub.f32 %v28, %v91
    %v118 = vsub.f32 %v29, %v66
    %v119 = vsub.f32 %v30, %v92
    %v120 = vsub.f32 %v31, %v70
    %v121 = vsub.f32 %v32, %v93
    %v122 = vsub.f32 %v33, %v74
    %v123 = vsub.f32 %v34, %v94
    %v124 = vsub.f32 %v35, %v78
    %v125 = vsub.f32 %v36, %v95
    %v126 = vsub.f32 %v37, %v82
    %v127 = vsub.f32 %v38, %v96
    %v128 = vsub.f32 %v39, %v86
    %v129 = vsub.f32 %v40, %v97
    %v130 = vmul.f32 %v114, %v114
    %v131 = vmul.f32 %v115, %v115
    %v132 = vmul.f32 %v116, %v116
    %v133 = vmul.f32 %v117, %v117
    %v134 = vmul.f32 %v118, %v118
    %v135 = vmul.f32 %v119, %v119
    %v136 = vmul.f32 %v120, %v120
    %v137 = vmul.f32 %v121, %v121
    %v138 = vmul.f32 %v122, %v122
    %v139 = vmul.f32 %v123, %v123
    %v140 = vmul.f32 %v124, %v124
    %v141 = vmul.f32 %v125, %v125
    %v142 = vmul.f32 %v126, %v126
    %v143 = vmul.f32 %v127, %v127
    %v144 = vmul.f32 %v128, %v128
    %v145 = vmul.f32 %v129, %v129
    %162 = vrot.lane.b32.xlu0 %v130, 112
    %v163 = vpop.permute.xlu0 %162
    %164 = vrot.lane.b32.xlu0 %v131, 112
    %v165 = vpop.permute.xlu0 %164
    %166 = vrot.lane.b32.xlu0 %v132, 112
    %v167 = vpop.permute.xlu0 %166
    %168 = vrot.lane.b32.xlu0 %v133, 112
    %v169 = vpop.permute.xlu0 %168
    %170 = vrot.lane.b32.xlu0 %v134, 112
    %v171 = vpop.permute.xlu0 %170
    %172 = vrot.lane.b32.xlu0 %v135, 112
    %v173 = vpop.permute.xlu0 %172
    %174 = vrot.lane.b32.xlu0 %v136, 112
    %v175 = vpop.permute.xlu0 %174
    %176 = vrot.lane.b32.xlu0 %v137, 112
    %v177 = vpop.permute.xlu0 %176
    %178 = vrot.lane.b32.xlu0 %v138, 112
    %v179 = vpop.permute.xlu0 %178
    %180 = vrot.lane.b32.xlu0 %v139, 112
    %v181 = vpop.permute.xlu0 %180
    %182 = vrot.lane.b32.xlu0 %v140, 112
    %v183 = vpop.permute.xlu0 %182
    %184 = vrot.lane.b32.xlu0 %v141, 112
    %v185 = vpop.permute.xlu0 %184
    %186 = vrot.lane.b32.xlu0 %v142, 112
    %v187 = vpop.permute.xlu0 %186
    %188 = vrot.lane.b32.xlu0 %v143, 112
    %v189 = vpop.permute.xlu0 %188
    %190 = vrot.lane.b32.xlu0 %v144, 112
    %v191 = vpop.permute.xlu0 %190
    %192 = vrot.lane.b32.xlu0 %v145, 112
    %v193 = vpop.permute.xlu0 %192
    %vm194 = vcmask 916480
    %v195 = vsel %vm194, %v163, %v165
    %v196 = vsel %vm194, %v167, %v169
    %v197 = vsel %vm194, %v171, %v173
    %v198 = vsel %vm194, %v175, %v177
    %v199 = vsel %vm194, %v179, %v181
    %v200 = vsel %vm194, %v183, %v185
    %v201 = vsel %vm194, %v187, %v189
    %v202 = vsel %vm194, %v191, %v193
    %v219 = vsel %vm194, %v165, 0.0
    %v220 = vadd.f32 %v195, %v219
    %v221 = vadd.f32 %v220, %v196
    %v222 = vsel %vm194, %v169, 0.0
    %v223 = vadd.f32 %v221, %v222
    %v224 = vadd.f32 %v223, %v197
    %v225 = vsel %vm194, %v173, 0.0
    %v226 = vadd.f32 %v224, %v225
    %v227 = vadd.f32 %v226, %v198
    %v228 = vsel %vm194, %v177, 0.0
    %v229 = vadd.f32 %v227, %v228
    %v230 = vadd.f32 %v229, %v199
    %v231 = vsel %vm194, %v181, 0.0
    %v232 = vadd.f32 %v230, %v231
    %v233 = vadd.f32 %v232, %v200
    %v234 = vsel %vm194, %v185, 0.0
    %v235 = vadd.f32 %v233, %v234
    %v236 = vadd.f32 %v235, %v201
    %v237 = vsel %vm194, %v189, 0.0
    %v238 = vadd.f32 %v236, %v237
    %v239 = vadd.f32 %v238, %v202
    %v240 = vsel %vm194, %v193, 0.0
    %v241 = vadd.f32 %v239, %v240
    %242 = vadd.xlane.f32.xlu0 %v241
    %v243 = vpop.xlane.xlu0 %242
    %v244 = vrot.slane %v243, 4
    %v245 = vadd.f32 %v243, %v244
    %v246 = vrot.slane %v245, 2
    %v247 = vadd.f32 %v245, %v246
    %v248 = vrot.slane %v247, 1
    %v249 = vadd.f32 %v247, %v248
    %s250 = vtos %v249
    %251 = vrot.lane.b32.xlu0 %v25, 1
    %v252 = vpop.permute.xlu0 %251
    %253 = vrot.lane.b32.xlu0 %v26, 1
    %v254 = vpop.permute.xlu0 %253
    %255 = vrot.lane.b32.xlu0 %v27, 1
    %v256 = vpop.permute.xlu0 %255
    %257 = vrot.lane.b32.xlu0 %v28, 1
    %v258 = vpop.permute.xlu0 %257
    %259 = vrot.lane.b32.xlu0 %v29, 1
    %v260 = vpop.permute.xlu0 %259
    %261 = vrot.lane.b32.xlu0 %v30, 1
    %v262 = vpop.permute.xlu0 %261
    %263 = vrot.lane.b32.xlu0 %v31, 1
    %v264 = vpop.permute.xlu0 %263
    %265 = vrot.lane.b32.xlu0 %v32, 1
    %v266 = vpop.permute.xlu0 %265
    %267 = vrot.lane.b32.xlu0 %v33, 1
    %v268 = vpop.permute.xlu0 %267
    %269 = vrot.lane.b32.xlu0 %v34, 1
    %v270 = vpop.permute.xlu0 %269
    %271 = vrot.lane.b32.xlu0 %v35, 1
    %v272 = vpop.permute.xlu0 %271
    %273 = vrot.lane.b32.xlu0 %v36, 1
    %v274 = vpop.permute.xlu0 %273
    %275 = vrot.lane.b32.xlu0 %v37, 1
    %v276 = vpop.permute.xlu0 %275
    %277 = vrot.lane.b32.xlu0 %v38, 1
    %v278 = vpop.permute.xlu0 %277
    %279 = vrot.lane.b32.xlu0 %v39, 1
    %v280 = vpop.permute.xlu0 %279
    %281 = vrot.lane.b32.xlu0 %v40, 1
    %v282 = vpop.permute.xlu0 %281
    %vm283 = vcmask 7168
    %v284 = vsel %vm283, %v252, %v254
    %v285 = vsel %vm283, %v256, %v258
    %v286 = vsel %vm283, %v260, %v262
    %v287 = vsel %vm283, %v264, %v266
    %v288 = vsel %vm283, %v268, %v270
    %v289 = vsel %vm283, %v272, %v274
    %v290 = vsel %vm283, %v276, %v278
    %v291 = vsel %vm283, %v280, %v282
    %v308 = vsub.f32 %v25, %v252
    %v309 = vsub.f32 %v26, %v284
    %v310 = vsub.f32 %v27, %v256
    %v311 = vsub.f32 %v28, %v285
    %v312 = vsub.f32 %v29, %v260
    %v313 = vsub.f32 %v30, %v286
    %v314 = vsub.f32 %v31, %v264
    %v315 = vsub.f32 %v32, %v287
    %v316 = vsub.f32 %v33, %v268
    %v317 = vsub.f32 %v34, %v288
    %v318 = vsub.f32 %v35, %v272
    %v319 = vsub.f32 %v36, %v289
    %v320 = vsub.f32 %v37, %v276
    %v321 = vsub.f32 %v38, %v290
    %v322 = vsub.f32 %v39, %v280
    %v323 = vsub.f32 %v40, %v291
    %v324 = vlaneseq
    %v325 = vand.u32 %v324, 127
    %v326 = vadd.s32 %v325, 128
    %vm327 = vcmp.lt.s32.totalorder %v325, 0
    %v328 = vsub.s32 0, %v325
    %v329 = vsel %vm327, %v328, %v325
    %v330 = vshrl.u32 %v329, 4
    %v331 = vand.u32 %v329, 15
    %v332 = vsub.s32 0, %v331
    %v333 = vsel %vm327, %v332, %v331
    %vm334 = vcmp.lt.s32.totalorder %v326, 0
    %v335 = vsub.s32 0, %v326
    %v336 = vsel %vm334, %v335, %v326
    %v337 = vshrl.u32 %v336, 4
    %v338 = vand.u32 %v336, 15
    %v339 = vsub.s32 0, %v338
    %v340 = vsel %vm334, %v339, %v338
    %vm341 = vcmp.ne.s32.totalorder %v333, 0
    %vm342 = vcmp.ne.s32.totalorder %v340, 0
    %vm343 = vcmp.lt.s32.totalorder %v333, 0
    %vm344 = vcmp.lt.s32.totalorder %v340, 0
    %vm345 = vmand %vm343, %vm341
    %vm346 = vmand %vm344, %vm342
    %v347 = vadd.s32 %v333, 16
    %v348 = vadd.s32 %v340, 16
    %v349 = vsel %vm345, %v347, %v333
    %v350 = vsel %vm346, %v348, %v340
    %vm351 = vcmp.ne.s32.totalorder %v349, 15
    %vm352 = vcmp.ne.s32.totalorder %v350, 15
    %369 = vrot.lane.b32.xlu0 %v308, 127
    %v370 = vpop.permute.xlu0 %369
    %371 = vrot.lane.b32.xlu0 %v309, 127
    %v372 = vpop.permute.xlu0 %371
    %373 = vrot.lane.b32.xlu0 %v310, 127
    %v374 = vpop.permute.xlu0 %373
    %375 = vrot.lane.b32.xlu0 %v311, 127
    %v376 = vpop.permute.xlu0 %375
    %377 = vrot.lane.b32.xlu0 %v312, 127
    %v378 = vpop.permute.xlu0 %377
    %379 = vrot.lane.b32.xlu0 %v313, 127
    %v380 = vpop.permute.xlu0 %379
    %381 = vrot.lane.b32.xlu0 %v314, 127
    %v382 = vpop.permute.xlu0 %381
    %383 = vrot.lane.b32.xlu0 %v315, 127
    %v384 = vpop.permute.xlu0 %383
    %385 = vrot.lane.b32.xlu0 %v316, 127
    %v386 = vpop.permute.xlu0 %385
    %387 = vrot.lane.b32.xlu0 %v317, 127
    %v388 = vpop.permute.xlu0 %387
    %389 = vrot.lane.b32.xlu0 %v318, 127
    %v390 = vpop.permute.xlu0 %389
    %391 = vrot.lane.b32.xlu0 %v319, 127
    %v392 = vpop.permute.xlu0 %391
    %393 = vrot.lane.b32.xlu0 %v320, 127
    %v394 = vpop.permute.xlu0 %393
    %395 = vrot.lane.b32.xlu0 %v321, 127
    %v396 = vpop.permute.xlu0 %395
    %397 = vrot.lane.b32.xlu0 %v322, 127
    %v398 = vpop.permute.xlu0 %397
    %399 = vrot.lane.b32.xlu0 %v323, 127
    %v400 = vpop.permute.xlu0 %399
    %vm401 = vcmask 1039360
    %v402 = vsel %vm401, %v370, %v372
    %v403 = vsel %vm401, %v374, %v376
    %v404 = vsel %vm401, %v378, %v380
    %v405 = vsel %vm401, %v382, %v384
    %v406 = vsel %vm401, %v386, %v388
    %v407 = vsel %vm401, %v390, %v392
    %v408 = vsel %vm401, %v394, %v396
    %v409 = vsel %vm401, %v398, %v400
    %v426 = vsel %vm351, %v402, 0.0
    %v427 = vsel %vm352, %v372, 0.0
    %v428 = vsel %vm351, %v403, 0.0
    %v429 = vsel %vm352, %v376, 0.0
    %v430 = vsel %vm351, %v404, 0.0
    %v431 = vsel %vm352, %v380, 0.0
    %v432 = vsel %vm351, %v405, 0.0
    %v433 = vsel %vm352, %v384, 0.0
    %v434 = vsel %vm351, %v406, 0.0
    %v435 = vsel %vm352, %v388, 0.0
    %v436 = vsel %vm351, %v407, 0.0
    %v437 = vsel %vm352, %v392, 0.0
    %v438 = vsel %vm351, %v408, 0.0
    %v439 = vsel %vm352, %v396, 0.0
    %v440 = vsel %vm351, %v409, 0.0
    %v441 = vsel %vm352, %v400, 0.0
    %v442 = vmul.f32 %v426, %v426
    %v443 = vmul.f32 %v427, %v427
    %v444 = vmul.f32 %v428, %v428
    %v445 = vmul.f32 %v429, %v429
    %v446 = vmul.f32 %v430, %v430
    %v447 = vmul.f32 %v431, %v431
    %v448 = vmul.f32 %v432, %v432
    %v449 = vmul.f32 %v433, %v433
    %v450 = vmul.f32 %v434, %v434
    %v451 = vmul.f32 %v435, %v435
    %v452 = vmul.f32 %v436, %v436
    %v453 = vmul.f32 %v437, %v437
    %v454 = vmul.f32 %v438, %v438
    %v455 = vmul.f32 %v439, %v439
    %v456 = vmul.f32 %v440, %v440
    %v457 = vmul.f32 %v441, %v441
    %v458 = vsel %vm401, %v443, 0.0
    %v459 = vadd.f32 %v442, %v458
    %v460 = vadd.f32 %v459, %v444
    %v461 = vsel %vm401, %v445, 0.0
    %v462 = vadd.f32 %v460, %v461
    %v463 = vadd.f32 %v462, %v446
    %v464 = vsel %vm401, %v447, 0.0
    %v465 = vadd.f32 %v463, %v464
    %v466 = vadd.f32 %v465, %v448
    %v467 = vsel %vm401, %v449, 0.0
    %v468 = vadd.f32 %v466, %v467
    %v469 = vadd.f32 %v468, %v450
    %v470 = vsel %vm401, %v451, 0.0
    %v471 = vadd.f32 %v469, %v470
    %v472 = vadd.f32 %v471, %v452
    %v473 = vsel %vm401, %v453, 0.0
    %v474 = vadd.f32 %v472, %v473
    %v475 = vadd.f32 %v474, %v454
    %v476 = vsel %vm401, %v455, 0.0
    %v477 = vadd.f32 %v475, %v476
    %v478 = vadd.f32 %v477, %v456
    %v479 = vsel %vm401, %v457, 0.0
    %v480 = vadd.f32 %v478, %v479
    %481 = vadd.xlane.f32.xlu0 %v480
    %v482 = vpop.xlane.xlu0 %481
    %v483 = vrot.slane %v482, 4
    %v484 = vadd.f32 %v482, %v483
    %v485 = vrot.slane %v484, 2
    %v486 = vadd.f32 %v484, %v485
    %v487 = vrot.slane %v486, 1
    %v488 = vadd.f32 %v486, %v487
    %s489 = vtos %v488
    %vm490 = vcmp.eq.s32.totalorder %v325, 0
    %vm491 = vcmp.eq.s32.totalorder %v325, 1
    %v492 = vstv %s489
    %v493 = vsel %vm491, %v492, 0.0
    %v494 = vstv %s250
    %v495 = vsel %vm490, %v494, %v493
    %496 = vst [vmem:[#allocation5] sm:$0x1] %v495
    // Predicated region
    $region10: #{tpu_custom_call.1} parent=1 // pred_check
      _
    $region11: #{tpu_custom_call.1} parent=1 // pred_check_branch
      %498 = sbr.rel (0) target = $region13
    $region12: #{tpu_custom_call.1} parent=1 // pred_region
      %500 = vsyncadd [#allocation4], 0
      %s502 = sshll.u32 [#allocation5], 4
      %s503 = int_to_ptr.vmem [resolvable:$true] %s502
      %s504 = sshll.u32 %s1, 4
      %s505 = int_to_ptr.hbm [resolvable:$true] %s504
      %507 = dma.vmem_to_hbm [thread:$0]  %s503, 16, %s505, [#allocation4]
    $region13: #{tpu_custom_call.1} parent=1 // pred_fallthru
      _
    // Predicated region
    $region14: #{tpu_custom_call.1} parent=1 // pred_check
      _
    $region15: #{tpu_custom_call.1} parent=1 // pred_check_branch
      %509 = sbr.rel (0) target = $region17
    $region16: #{tpu_custom_call.1} parent=1 // pred_region
      %511 = dma.done [#allocation4], 16
    $region17: #{tpu_custom_call.1} parent=1 // pred_fallthru
      _
    %512 = vsyncpa [#allocation3], 1
    %513 = vsyncpa [#allocation4], 1

</llo_original>
